<compile_context>
chip_gen: v6e
topology: v6e:2x2x1
jax: 0.10.0
libtpu: 0.0.40
codegen_flags: <defaults>
</compile_context>

<pallas_src>
import jax
import jax.numpy as jnp
from jax import lax
from jax.experimental import pallas as pl

EMBED_DIM = 32
NUM_HEADS = 4
HEAD_DIM = EMBED_DIM // NUM_HEADS
FF_DIM = 64
SEQ = 8
BATCH = 2
LN_EPS = 1e-5
VEC_ROWS = 8        # packed bias / LayerNorm vector rows at the top of the act slab
ACT_LANES = 128     # lane width of the activation slab
OUT_LANES = 128     # lane-dense output width


def _layernorm(x, gamma, beta):
    mu = jnp.mean(x, axis=-1, keepdims=True)
    var = jnp.mean((x - mu) ** 2, axis=-1, keepdims=True)
    return (x - mu) * lax.rsqrt(var + LN_EPS) * gamma + beta


def card_transformer_kernel(act_ref, w_ref, out_ref):
    E, H, Dh, F = EMBED_DIM, NUM_HEADS, HEAD_DIM, FF_DIM
    N = out_ref.shape[0]
    bf16, f32 = jnp.bfloat16, jnp.float32

    # ---- f32 activation/vector slab ------------------------------------------------
    bqkv = act_ref[0:1, 0:3 * E]
    bo   = act_ref[1:2, 0:E]
    g1   = act_ref[2:3, 0:E]
    be1  = act_ref[3:4, 0:E]
    b1   = act_ref[4:5, 0:F]
    b2   = act_ref[5:6, 0:E]
    g2   = act_ref[6:7, 0:E]
    be2  = act_ref[7:8, 0:E]

    x         = act_ref[VEC_ROWS:VEC_ROWS + N, 0:E]                  # (N, E)
    bias      = act_ref[VEC_ROWS:VEC_ROWS + N, E:E + N]              # (N, N) additive mask
    row_valid = act_ref[VEC_ROWS:VEC_ROWS + N, E + N:E + N + 1]      # (N, 1)

    # ---- bf16 weight slab (pre-transposed: y = x @ W) ------------------------------
    wqkv = w_ref[0:E, 0:3 * E]            # (E, 3E)  fused [Wq | Wk | Wv]
    wo   = w_ref[E:2 * E, 0:E]            # (E, E)
    w1   = w_ref[2 * E:3 * E, 0:F]        # (E, F)
    w2   = w_ref[3 * E:3 * E + F, 0:E]    # (F, E)

    # ---- fused QKV projection (one MXU pass, bf16 operands, f32 accumulation) ------
    qkv = jnp.dot(x.astype(bf16), wqkv, preferred_element_type=f32) + bqkv   # (N, 3E)
    scale = 1.0 / (Dh ** 0.5)
    q = qkv[:, 0:E] * scale               # fold 1/sqrt(Dh) into q once (f32)
    k = qkv[:, E:2 * E].astype(bf16)
    v = qkv[:, 2 * E:3 * E].astype(bf16)

    # ---- batched multi-head attention: one score matmul / softmax / PV matmul ------
    lane = lax.broadcasted_iota(jnp.int32, (1, E), 1)
    hms = [jnp.where((lane >= h * Dh) & (lane < (h + 1) * Dh), 1.0, 0.0)
           for h in range(H)]                                        # H × (1, E) lane masks
    q_stack = jnp.concatenate([q * hm for hm in hms], axis=0)        # (H*N, E)
    bias_stack = jnp.concatenate([bias] * H, axis=0)                 # (H*N, N)

    s = lax.dot_general(q_stack.astype(bf16), k, (((1,), (1,)), ((), ())),
                        preferred_element_type=f32) + bias_stack     # (H*N, N)
    m = jnp.max(s, axis=-1, keepdims=True)
    p = jnp.exp(s - m)
    denom = jnp.sum(p, axis=-1, keepdims=True)
    attn = p * pl.reciprocal(denom, approx=True)

    pv = jnp.dot(attn.astype(bf16), v, preferred_element_type=f32)   # (H*N, E)
    # Mask each head's row-block to its own lane range and sum: == head concat.
    attn_out = (pv[0 * N:1 * N] * hms[0] + pv[1 * N:2 * N] * hms[1]
                + pv[2 * N:3 * N] * hms[2] + pv[3 * N:4 * N] * hms[3])  # (N, E)

    mha = jnp.dot(attn_out.astype(bf16), wo, preferred_element_type=f32) + bo
    # Fully-padded batch elements get exactly zero MHA (PyTorch fallback path).
    mha = mha * row_valid

    h1 = _layernorm(x + mha, g1, be1)
    ff = jnp.maximum(jnp.dot(h1.astype(bf16), w1, preferred_element_type=f32) + b1, 0.0)
    ff2 = jnp.dot(ff.astype(bf16), w2, preferred_element_type=f32) + b2
    y = _layernorm(h1 + ff2, g2, be2)                                 # (N, E)

    # Lane-dense store: pad to 128 lanes; the wrapper slices the first E back off.
    pad = jnp.zeros((N, OUT_LANES - E), f32)
    out_ref[...] = jnp.concatenate([y, pad], axis=-1)


def card_transformer(x_card, x_mask, params):
    B, S, E = x_card.shape
    F = FF_DIM
    N = B * S
    assert E + N + 1 <= ACT_LANES, "activation slab lane budget exceeded"

    x_flat = x_card.reshape(N, E).astype(jnp.float32)

    # (N, N) additive score bias: 0 where query row i may attend key row j
    # (same batch element AND key not padded), else -1e9.
    batch_id = jnp.arange(N, dtype=jnp.int32) // S
    same_batch = batch_id[:, None] == batch_id[None, :]
    key_valid = jnp.logical_not(x_mask.reshape(N))[None, :]
    bias = jnp.where(same_batch & key_valid, 0.0, -1e9).astype(jnp.float32)

    # Per-row valid flag (0 for rows of a fully-padded batch element), precomputed
    # here so the kernel does not need a lane-reduce over the bias.
    row_valid = jnp.any(jnp.logical_not(x_mask), axis=1).astype(jnp.float32)   # (B,)
    row_valid = jnp.repeat(row_valid, S)[:, None]                              # (N, 1)

    # ---- single f32 activation slab: 8 vector rows + N activation rows -------------
    vec = jnp.zeros((VEC_ROWS, ACT_LANES), jnp.float32)
    bqkv = jnp.concatenate([params["bq"], params["bk"], params["bv"]], axis=1)
    vec = vec.at[0, 0:3 * E].set(bqkv[0])
    vec = vec.at[1, 0:E].set(params["bo"][0])
    vec = vec.at[2, 0:E].set(params["g1"][0])
    vec = vec.at[3, 0:E].set(params["be1"][0])
    vec = vec.at[4, 0:F].set(params["b1"][0])
    vec = vec.at[5, 0:E].set(params["b2"][0])
    vec = vec.at[6, 0:E].set(params["g2"][0])
    vec = vec.at[7, 0:E].set(params["be2"][0])

    act = jnp.zeros((N, ACT_LANES), jnp.float32)
    act = act.at[:, 0:E].set(x_flat)
    act = act.at[:, E:E + N].set(bias)
    act = act.at[:, E + N:E + N + 1].set(row_valid)
    act_slab = jnp.concatenate([vec, act], axis=0)        # (8+N, 128) f32

    # ---- single bf16 weight slab, pre-transposed, lanes trimmed to 3E ---------------
    wqkv_t = jnp.concatenate(
        [params["wq"].T, params["wk"].T, params["wv"].T], axis=1)   # (E, 3E)
    w_slab = jnp.zeros((3 * E + F, 3 * E), jnp.float32)
    w_slab = w_slab.at[0:E, 0:3 * E].set(wqkv_t)
    w_slab = w_slab.at[E:2 * E, 0:E].set(params["wo"].T)
    w_slab = w_slab.at[2 * E:3 * E, 0:F].set(params["w1"].T)
    w_slab = w_slab.at[3 * E:3 * E + F, 0:E].set(params["w2"].T)
    w_slab = w_slab.astype(jnp.bfloat16)                   # (160, 96) bf16

    # Single grid-less invocation: two full-array VMEM operands, one lane-dense output.
    out = pl.pallas_call(
        card_transformer_kernel,
        out_shape=jax.ShapeDtypeStruct((N, OUT_LANES), jnp.float32),
    )(act_slab, w_slab)
    return out[:, :E].reshape(B, S, E)


def make_params(key):
    names_shapes = [
        ("wq", (EMBED_DIM, EMBED_DIM)), ("bq", (1, EMBED_DIM)),
        ("wk", (EMBED_DIM, EMBED_DIM)), ("bk", (1, EMBED_DIM)),
        ("wv", (EMBED_DIM, EMBED_DIM)), ("bv", (1, EMBED_DIM)),
        ("wo", (EMBED_DIM, EMBED_DIM)), ("bo", (1, EMBED_DIM)),
        ("w1", (FF_DIM, EMBED_DIM)), ("b1", (1, FF_DIM)),
        ("w2", (EMBED_DIM, FF_DIM)), ("b2", (1, EMBED_DIM)),
    ]
    params = {}
    keys = jax.random.split(key, len(names_shapes))
    for (name, shape), k in zip(names_shapes, keys):
        params[name] = (0.05 * jax.random.normal(k, shape)).astype(jnp.float32)
    params["g1"] = jnp.ones((1, EMBED_DIM), jnp.float32)
    params["be1"] = jnp.full((1, EMBED_DIM), 0.01, jnp.float32)
    params["g2"] = jnp.ones((1, EMBED_DIM), jnp.float32)
    params["be2"] = jnp.full((1, EMBED_DIM), -0.01, jnp.float32)
    return params


def reference_forward(x, mask_bool, P):
    B, S, E = x.shape
    H, Dh = NUM_HEADS, HEAD_DIM
    q = x @ P["wq"].T + P["bq"][0]
    k = x @ P["wk"].T + P["bk"][0]
    v = x @ P["wv"].T + P["bv"][0]
    q = q.reshape(B, S, H, Dh).transpose(0, 2, 1, 3)
    k = k.reshape(B, S, H, Dh).transpose(0, 2, 1, 3)
    v = v.reshape(B, S, H, Dh).transpose(0, 2, 1, 3)
    s = jnp.einsum("bhqd,bhkd->bhqk", q, k) / jnp.sqrt(jnp.float32(Dh))
    s = s + jnp.where(mask_bool, -1e9, 0.0)[:, None, None, :]
    p = jax.nn.softmax(s, axis=-1)
    o = jnp.einsum("bhqk,bhkd->bhqd", p, v).transpose(0, 2, 1, 3).reshape(B, S, E)
    mha = o @ P["wo"].T + P["bo"][0]
    empty = jnp.all(mask_bool, axis=1)
    mha = jnp.where(empty[:, None, None], 0.0, mha)

    def ln(t, g, b):
        mu = t.mean(-1, keepdims=True)
        var = ((t - mu) ** 2).mean(-1, keepdims=True)
        return (t - mu) / jnp.sqrt(var + LN_EPS) * g[0] + b[0]

    h1 = ln(x + mha, P["g1"], P["be1"])
    ff = jnp.maximum(h1 @ P["w1"].T + P["b1"][0], 0.0) @ P["w2"].T + P["b2"][0]
    return ln(h1 + ff, P["g2"], P["be2"])


if __name__ == "__main__":
    key = jax.random.PRNGKey(0)
    k_x, k_p = jax.random.split(key)

    x_card = jax.random.normal(k_x, (BATCH, SEQ, EMBED_DIM), jnp.float32)
    # batch 0: last 3 keys padded; batch 1: fully padded (exercises the zero fallback)
    x_mask = jnp.array(
        [[False] * 5 + [True] * 3,
         [True] * SEQ],
        dtype=jnp.bool_,
    )

    params = make_params(k_p)

    out = jax.jit(card_transformer)(x_card, x_mask, params)
    out = jax.block_until_ready(out)

    ref = jax.block_until_ready(reference_forward(x_card, x_mask, params))
    assert out.shape == (BATCH, SEQ, EMBED_DIM)
    # Tolerance 2e-2: MXU operands are bf16 (weights stored bf16, activations cast
    # per-matmul) with f32 accumulation; softmax/LayerNorm math stays f32.
    assert jnp.allclose(out, ref, atol=2e-2, rtol=2e-2), "mismatch vs JAX reference"

    print("KERNEL_OK")
</pallas_src>

<mosaic_0001>
module attributes {stable_mosaic.version = 11 : i64} {
  func.func @card_transformer_kernel(%arg0: memref<24x128xf32, #tpu.memory_space<vmem>>, %arg1: memref<160x96xbf16, #tpu.memory_space<vmem>>, %arg2: memref<16x128xf32, #tpu.memory_space<vmem>>) attributes {dimension_semantics = [], scalar_prefetch = 0 : i64, scratch_operands = 0 : i64, tpu.core_type = #tpu.core_type<tc>} {
    %c0 = arith.constant 0 : index
    %c0_0 = arith.constant 0 : index
    %0 = vector.load %arg0[%c0, %c0_0] : memref<24x128xf32, #tpu.memory_space<vmem>>, vector<1x96xf32>
    %c1 = arith.constant 1 : index
    %c0_1 = arith.constant 0 : index
    %1 = vector.load %arg0[%c1, %c0_1] : memref<24x128xf32, #tpu.memory_space<vmem>>, vector<1x32xf32>
    %c2 = arith.constant 2 : index
    %c0_2 = arith.constant 0 : index
    %2 = vector.load %arg0[%c2, %c0_2] : memref<24x128xf32, #tpu.memory_space<vmem>>, vector<1x32xf32>
    %c3 = arith.constant 3 : index
    %c0_3 = arith.constant 0 : index
    %3 = vector.load %arg0[%c3, %c0_3] : memref<24x128xf32, #tpu.memory_space<vmem>>, vector<1x32xf32>
    %c4 = arith.constant 4 : index
    %c0_4 = arith.constant 0 : index
    %4 = vector.load %arg0[%c4, %c0_4] : memref<24x128xf32, #tpu.memory_space<vmem>>, vector<1x64xf32>
    %c5 = arith.constant 5 : index
    %c0_5 = arith.constant 0 : index
    %5 = vector.load %arg0[%c5, %c0_5] : memref<24x128xf32, #tpu.memory_space<vmem>>, vector<1x32xf32>
    %c6 = arith.constant 6 : index
    %c0_6 = arith.constant 0 : index
    %6 = vector.load %arg0[%c6, %c0_6] : memref<24x128xf32, #tpu.memory_space<vmem>>, vector<1x32xf32>
    %c7 = arith.constant 7 : index
    %c0_7 = arith.constant 0 : index
    %7 = vector.load %arg0[%c7, %c0_7] : memref<24x128xf32, #tpu.memory_space<vmem>>, vector<1x32xf32>
    %c8 = arith.constant 8 : index
    %c0_8 = arith.constant 0 : index
    %8 = vector.load %arg0[%c8, %c0_8] : memref<24x128xf32, #tpu.memory_space<vmem>>, vector<16x32xf32>
    %c8_9 = arith.constant 8 : index
    %c32 = arith.constant 32 : index
    %9 = vector.load %arg0[%c8_9, %c32] : memref<24x128xf32, #tpu.memory_space<vmem>>, vector<16x16xf32>
    %c8_10 = arith.constant 8 : index
    %c48 = arith.constant 48 : index
    %10 = vector.load %arg0[%c8_10, %c48] : memref<24x128xf32, #tpu.memory_space<vmem>>, vector<16x1xf32>
    %c0_11 = arith.constant 0 : index
    %c0_12 = arith.constant 0 : index
    %11 = vector.load %arg1[%c0_11, %c0_12] : memref<160x96xbf16, #tpu.memory_space<vmem>>, vector<32x96xbf16>
    %c32_13 = arith.constant 32 : index
    %c0_14 = arith.constant 0 : index
    %12 = vector.load %arg1[%c32_13, %c0_14] : memref<160x96xbf16, #tpu.memory_space<vmem>>, vector<32x32xbf16>
    %c64 = arith.constant 64 : index
    %c0_15 = arith.constant 0 : index
    %13 = vector.load %arg1[%c64, %c0_15] : memref<160x96xbf16, #tpu.memory_space<vmem>>, vector<32x64xbf16>
    %c96 = arith.constant 96 : index
    %c0_16 = arith.constant 0 : index
    %14 = vector.load %arg1[%c96, %c0_16] : memref<160x96xbf16, #tpu.memory_space<vmem>>, vector<64x32xbf16>
    %15 = arith.truncf %8 : vector<16x32xf32> to vector<16x32xbf16>
    %cst = arith.constant dense<0.000000e+00> : vector<16x96xf32>
    %16 = tpu.matmul %15, %11, %cst {dimension_numbers = #tpu.dot_dimension_numbers<[1], [0], [0], [1], [0, 0, 1, 1], [], []>} : vector<16x32xbf16>, vector<32x96xbf16>, vector<16x96xf32> -> vector<16x96xf32>
    %17 = vector.broadcast %0 : vector<1x96xf32> to vector<16x96xf32>
    %18 = arith.addf %16, %17 : vector<16x96xf32>
    %19 = vector.extract_strided_slice %18 {offsets = [0, 0], sizes = [16, 32], strides = [1, 1]} : vector<16x96xf32> to vector<16x32xf32>
    %cst_17 = arith.constant 0.353553385 : f32
    %20 = vector.broadcast %cst_17 : f32 to vector<16x32xf32>
    %21 = arith.mulf %19, %20 : vector<16x32xf32>
    %22 = vector.extract_strided_slice %18 {offsets = [0, 32], sizes = [16, 32], strides = [1, 1]} : vector<16x96xf32> to vector<16x32xf32>
    %23 = arith.truncf %22 : vector<16x32xf32> to vector<16x32xbf16>
    %24 = vector.extract_strided_slice %18 {offsets = [0, 64], sizes = [16, 32], strides = [1, 1]} : vector<16x96xf32> to vector<16x32xf32>
    %25 = arith.truncf %24 : vector<16x32xf32> to vector<16x32xbf16>
    %26 = tpu.iota {dimensions = array<i32: 1>} : vector<1x32xi32>
    %c0_i32 = arith.constant 0 : i32
    %27 = vector.broadcast %c0_i32 : i32 to vector<1x32xi32>
    %28 = arith.cmpi sge, %26, %27 : vector<1x32xi32>
    %c8_i32 = arith.constant 8 : i32
    %29 = vector.broadcast %c8_i32 : i32 to vector<1x32xi32>
    %30 = arith.cmpi slt, %26, %29 : vector<1x32xi32>
    %31 = arith.andi %28, %30 : vector<1x32xi1>
    %cst_18 = arith.constant 1.000000e+00 : f32
    %cst_19 = arith.constant 0.000000e+00 : f32
    %32 = vector.broadcast %cst_18 : f32 to vector<1x32xf32>
    %33 = vector.broadcast %cst_19 : f32 to vector<1x32xf32>
    %34 = arith.select %31, %32, %33 : vector<1x32xi1>, vector<1x32xf32>
    %c8_i32_20 = arith.constant 8 : i32
    %35 = vector.broadcast %c8_i32_20 : i32 to vector<1x32xi32>
    %36 = arith.cmpi sge, %26, %35 : vector<1x32xi32>
    %c16_i32 = arith.constant 16 : i32
    %37 = vector.broadcast %c16_i32 : i32 to vector<1x32xi32>
    %38 = arith.cmpi slt, %26, %37 : vector<1x32xi32>
    %39 = arith.andi %36, %38 : vector<1x32xi1>
    %cst_21 = arith.constant 1.000000e+00 : f32
    %cst_22 = arith.constant 0.000000e+00 : f32
    %40 = vector.broadcast %cst_21 : f32 to vector<1x32xf32>
    %41 = vector.broadcast %cst_22 : f32 to vector<1x32xf32>
    %42 = arith.select %39, %40, %41 : vector<1x32xi1>, vector<1x32xf32>
    %c16_i32_23 = arith.constant 16 : i32
    %43 = vector.broadcast %c16_i32_23 : i32 to vector<1x32xi32>
    %44 = arith.cmpi sge, %26, %43 : vector<1x32xi32>
    %c24_i32 = arith.constant 24 : i32
    %45 = vector.broadcast %c24_i32 : i32 to vector<1x32xi32>
    %46 = arith.cmpi slt, %26, %45 : vector<1x32xi32>
    %47 = arith.andi %44, %46 : vector<1x32xi1>
    %cst_24 = arith.constant 1.000000e+00 : f32
    %cst_25 = arith.constant 0.000000e+00 : f32
    %48 = vector.broadcast %cst_24 : f32 to vector<1x32xf32>
    %49 = vector.broadcast %cst_25 : f32 to vector<1x32xf32>
    %50 = arith.select %47, %48, %49 : vector<1x32xi1>, vector<1x32xf32>
    %c24_i32_26 = arith.constant 24 : i32
    %51 = vector.broadcast %c24_i32_26 : i32 to vector<1x32xi32>
    %52 = arith.cmpi sge, %26, %51 : vector<1x32xi32>
    %c32_i32 = arith.constant 32 : i32
    %53 = vector.broadcast %c32_i32 : i32 to vector<1x32xi32>
    %54 = arith.cmpi slt, %26, %53 : vector<1x32xi32>
    %55 = arith.andi %52, %54 : vector<1x32xi1>
    %cst_27 = arith.constant 1.000000e+00 : f32
    %cst_28 = arith.constant 0.000000e+00 : f32
    %56 = vector.broadcast %cst_27 : f32 to vector<1x32xf32>
    %57 = vector.broadcast %cst_28 : f32 to vector<1x32xf32>
    %58 = arith.select %55, %56, %57 : vector<1x32xi1>, vector<1x32xf32>
    %59 = vector.broadcast %34 : vector<1x32xf32> to vector<16x32xf32>
    %60 = arith.mulf %21, %59 : vector<16x32xf32>
    %61 = vector.broadcast %42 : vector<1x32xf32> to vector<16x32xf32>
    %62 = arith.mulf %21, %61 : vector<16x32xf32>
    %63 = vector.broadcast %50 : vector<1x32xf32> to vector<16x32xf32>
    %64 = arith.mulf %21, %63 : vector<16x32xf32>
    %65 = vector.broadcast %58 : vector<1x32xf32> to vector<16x32xf32>
    %66 = arith.mulf %21, %65 : vector<16x32xf32>
    %67 = tpu.concatenate %60, %62, %64, %66 in 0 : vector<16x32xf32>, vector<16x32xf32>, vector<16x32xf32>, vector<16x32xf32> -> vector<64x32xf32>
    %68 = tpu.concatenate %9, %9, %9, %9 in 0 : vector<16x16xf32>, vector<16x16xf32>, vector<16x16xf32>, vector<16x16xf32> -> vector<64x16xf32>
    %69 = arith.truncf %67 : vector<64x32xf32> to vector<64x32xbf16>
    %cst_29 = arith.constant dense<0.000000e+00> : vector<64x16xf32>
    %70 = tpu.matmul %69, %23, %cst_29 {dimension_numbers = #tpu.dot_dimension_numbers<[1], [1], [0], [0], [0, 0, 1, 0], [], []>} : vector<64x32xbf16>, vector<16x32xbf16>, vector<64x16xf32> -> vector<64x16xf32>
    %71 = arith.addf %70, %68 : vector<64x16xf32>
    %cst_30 = arith.constant dense<0xFF800000> : vector<64xf32>
    %72 = vector.multi_reduction <maximumf>, %71, %cst_30 [1] : vector<64x16xf32> to vector<64xf32>
    %73 = vector.shape_cast %72 : vector<64xf32> to vector<64x1xf32>
    %74 = vector.broadcast %73 : vector<64x1xf32> to vector<64x16xf32>
    %75 = arith.subf %71, %74 : vector<64x16xf32>
    %76 = math.exp %75 : vector<64x16xf32>
    %cst_31 = arith.constant dense<0.000000e+00> : vector<64xf32>
    %77 = vector.multi_reduction <add>, %76, %cst_31 [1] : vector<64x16xf32> to vector<64xf32>
    %78 = vector.shape_cast %77 : vector<64xf32> to vector<64x1xf32>
    %79 = tpu.reciprocal %78 {approx = true} : vector<64x1xf32> -> vector<64x1xf32>
    %80 = vector.broadcast %79 : vector<64x1xf32> to vector<64x16xf32>
    %81 = arith.mulf %76, %80 : vector<64x16xf32>
    %82 = arith.truncf %81 : vector<64x16xf32> to vector<64x16xbf16>
    %cst_32 = arith.constant dense<0.000000e+00> : vector<64x32xf32>
    %83 = tpu.matmul %82, %25, %cst_32 {dimension_numbers = #tpu.dot_dimension_numbers<[1], [0], [0], [1], [0, 0, 1, 1], [], []>} : vector<64x16xbf16>, vector<16x32xbf16>, vector<64x32xf32> -> vector<64x32xf32>
    %84 = vector.extract_strided_slice %83 {offsets = [0, 0], sizes = [16, 32], strides = [1, 1]} : vector<64x32xf32> to vector<16x32xf32>
    %85 = vector.broadcast %34 : vector<1x32xf32> to vector<16x32xf32>
    %86 = arith.mulf %84, %85 : vector<16x32xf32>
    %87 = vector.extract_strided_slice %83 {offsets = [16, 0], sizes = [16, 32], strides = [1, 1]} : vector<64x32xf32> to vector<16x32xf32>
    %88 = vector.broadcast %42 : vector<1x32xf32> to vector<16x32xf32>
    %89 = arith.mulf %87, %88 : vector<16x32xf32>
    %90 = arith.addf %86, %89 : vector<16x32xf32>
    %91 = vector.extract_strided_slice %83 {offsets = [32, 0], sizes = [16, 32], strides = [1, 1]} : vector<64x32xf32> to vector<16x32xf32>
    %92 = vector.broadcast %50 : vector<1x32xf32> to vector<16x32xf32>
    %93 = arith.mulf %91, %92 : vector<16x32xf32>
    %94 = arith.addf %90, %93 : vector<16x32xf32>
    %95 = vector.extract_strided_slice %83 {offsets = [48, 0], sizes = [16, 32], strides = [1, 1]} : vector<64x32xf32> to vector<16x32xf32>
    %96 = vector.broadcast %58 : vector<1x32xf32> to vector<16x32xf32>
    %97 = arith.mulf %95, %96 : vector<16x32xf32>
    %98 = arith.addf %94, %97 : vector<16x32xf32>
    %99 = arith.truncf %98 : vector<16x32xf32> to vector<16x32xbf16>
    %cst_33 = arith.constant dense<0.000000e+00> : vector<16x32xf32>
    %100 = tpu.matmul %99, %12, %cst_33 {dimension_numbers = #tpu.dot_dimension_numbers<[1], [0], [0], [1], [0, 0, 1, 1], [], []>} : vector<16x32xbf16>, vector<32x32xbf16>, vector<16x32xf32> -> vector<16x32xf32>
    %101 = vector.broadcast %1 : vector<1x32xf32> to vector<16x32xf32>
    %102 = arith.addf %100, %101 : vector<16x32xf32>
    %103 = vector.broadcast %10 : vector<16x1xf32> to vector<16x32xf32>
    %104 = arith.mulf %102, %103 : vector<16x32xf32>
    %105 = arith.addf %8, %104 : vector<16x32xf32>
    %cst_34 = arith.constant dense<0.000000e+00> : vector<16xf32>
    %106 = vector.multi_reduction <add>, %105, %cst_34 [1] : vector<16x32xf32> to vector<16xf32>
    %107 = vector.shape_cast %106 : vector<16xf32> to vector<16x1xf32>
    %cst_35 = arith.constant 3.200000e+01 : f32
    %108 = vector.broadcast %cst_35 : f32 to vector<16x1xf32>
    %109 = arith.divf %107, %108 : vector<16x1xf32>
    %110 = vector.broadcast %109 : vector<16x1xf32> to vector<16x32xf32>
    %111 = arith.subf %105, %110 : vector<16x32xf32>
    %112 = arith.mulf %111, %111 : vector<16x32xf32>
    %cst_36 = arith.constant dense<0.000000e+00> : vector<16xf32>
    %113 = vector.multi_reduction <add>, %112, %cst_36 [1] : vector<16x32xf32> to vector<16xf32>
    %114 = vector.shape_cast %113 : vector<16xf32> to vector<16x1xf32>
    %cst_37 = arith.constant 3.200000e+01 : f32
    %115 = vector.broadcast %cst_37 : f32 to vector<16x1xf32>
    %116 = arith.divf %114, %115 : vector<16x1xf32>
    %117 = vector.broadcast %109 : vector<16x1xf32> to vector<16x32xf32>
    %118 = arith.subf %105, %117 : vector<16x32xf32>
    %cst_38 = arith.constant 9.99999974E-6 : f32
    %119 = vector.broadcast %cst_38 : f32 to vector<16x1xf32>
    %120 = arith.addf %116, %119 : vector<16x1xf32>
    %121 = math.rsqrt %120 : vector<16x1xf32>
    %122 = vector.broadcast %121 : vector<16x1xf32> to vector<16x32xf32>
    %123 = arith.mulf %118, %122 : vector<16x32xf32>
    %124 = vector.broadcast %2 : vector<1x32xf32> to vector<16x32xf32>
    %125 = arith.mulf %123, %124 : vector<16x32xf32>
    %126 = vector.broadcast %3 : vector<1x32xf32> to vector<16x32xf32>
    %127 = arith.addf %125, %126 : vector<16x32xf32>
    %128 = arith.truncf %127 : vector<16x32xf32> to vector<16x32xbf16>
    %cst_39 = arith.constant dense<0.000000e+00> : vector<16x64xf32>
    %129 = tpu.matmul %128, %13, %cst_39 {dimension_numbers = #tpu.dot_dimension_numbers<[1], [0], [0], [1], [0, 0, 1, 1], [], []>} : vector<16x32xbf16>, vector<32x64xbf16>, vector<16x64xf32> -> vector<16x64xf32>
    %130 = vector.broadcast %4 : vector<1x64xf32> to vector<16x64xf32>
    %131 = arith.addf %129, %130 : vector<16x64xf32>
    %cst_40 = arith.constant 0.000000e+00 : f32
    %132 = vector.broadcast %cst_40 : f32 to vector<16x64xf32>
    %133 = arith.maximumf %131, %132 : vector<16x64xf32>
    %134 = arith.truncf %133 : vector<16x64xf32> to vector<16x64xbf16>
    %cst_41 = arith.constant dense<0.000000e+00> : vector<16x32xf32>
    %135 = tpu.matmul %134, %14, %cst_41 {dimension_numbers = #tpu.dot_dimension_numbers<[1], [0], [0], [1], [0, 0, 1, 1], [], []>} : vector<16x64xbf16>, vector<64x32xbf16>, vector<16x32xf32> -> vector<16x32xf32>
    %136 = vector.broadcast %5 : vector<1x32xf32> to vector<16x32xf32>
    %137 = arith.addf %135, %136 : vector<16x32xf32>
    %138 = arith.addf %127, %137 : vector<16x32xf32>
    %cst_42 = arith.constant dense<0.000000e+00> : vector<16xf32>
    %139 = vector.multi_reduction <add>, %138, %cst_42 [1] : vector<16x32xf32> to vector<16xf32>
    %140 = vector.shape_cast %139 : vector<16xf32> to vector<16x1xf32>
    %cst_43 = arith.constant 3.200000e+01 : f32
    %141 = vector.broadcast %cst_43 : f32 to vector<16x1xf32>
    %142 = arith.divf %140, %141 : vector<16x1xf32>
    %143 = vector.broadcast %142 : vector<16x1xf32> to vector<16x32xf32>
    %144 = arith.subf %138, %143 : vector<16x32xf32>
    %145 = arith.mulf %144, %144 : vector<16x32xf32>
    %cst_44 = arith.constant dense<0.000000e+00> : vector<16xf32>
    %146 = vector.multi_reduction <add>, %145, %cst_44 [1] : vector<16x32xf32> to vector<16xf32>
    %147 = vector.shape_cast %146 : vector<16xf32> to vector<16x1xf32>
    %cst_45 = arith.constant 3.200000e+01 : f32
    %148 = vector.broadcast %cst_45 : f32 to vector<16x1xf32>
    %149 = arith.divf %147, %148 : vector<16x1xf32>
    %150 = vector.broadcast %142 : vector<16x1xf32> to vector<16x32xf32>
    %151 = arith.subf %138, %150 : vector<16x32xf32>
    %cst_46 = arith.constant 9.99999974E-6 : f32
    %152 = vector.broadcast %cst_46 : f32 to vector<16x1xf32>
    %153 = arith.addf %149, %152 : vector<16x1xf32>
    %154 = math.rsqrt %153 : vector<16x1xf32>
    %155 = vector.broadcast %154 : vector<16x1xf32> to vector<16x32xf32>
    %156 = arith.mulf %151, %155 : vector<16x32xf32>
    %157 = vector.broadcast %6 : vector<1x32xf32> to vector<16x32xf32>
    %158 = arith.mulf %156, %157 : vector<16x32xf32>
    %159 = vector.broadcast %7 : vector<1x32xf32> to vector<16x32xf32>
    %160 = arith.addf %158, %159 : vector<16x32xf32>
    %cst_47 = arith.constant 0.000000e+00 : f32
    %161 = vector.broadcast %cst_47 : f32 to vector<16x96xf32>
    %162 = tpu.concatenate %160, %161 in 1 : vector<16x32xf32>, vector<16x96xf32> -> vector<16x128xf32>
    %c0_48 = arith.constant 0 : index
    %c0_49 = arith.constant 0 : index
    %163 = vector.load %arg2[%c0_48, %c0_49] : memref<16x128xf32, #tpu.memory_space<vmem>>, vector<16x128xf32>
    tpu.vector_store %arg2[%c0_48, %c0_49], %162 {strides = array<i32>} : memref<16x128xf32, #tpu.memory_space<vmem>>, vector<16x128xf32>,
    return
  }
}

</mosaic_0001>

<llo_original>
// kernel: card_transformer.1
$region0: #{card_transformer.1}
  #allocation0 [shape = 'u32[]', space=smem, size = 0x4, offset = 0x4, fixed_abs, tag = 'smem constant byte address 0x4 - core index']
  #allocation1 [shape = 'u32[144,128]{1,0:T(1,128)}', space=vmem, size = 0x12000, scoped, tag = 'internal scratch']
  %s0 = inlined_call_operand.vmem [shape: f32[24,128], index: 0, kind: input, shape index: {}]
  %s1 = inlined_call_operand.vmem [shape: bf16[160,96], index: 1, kind: input, shape index: {}]
  %s2 = inlined_call_operand.vmem [shape: f32[16,128], index: 2, kind: output, shape index: {}]
  %s3 = sld [smem:[#allocation0]]
  $region18: #{card_transformer.1} parent=0
    _
  %s5 = ssub.s32 1, %s3
  %s6 = scalar_select 0, %s5, %s3
  // Predicated region
  $region2: #{card_transformer.1} parent=0 // pred_check
    _
  $region3: #{card_transformer.1} parent=0 // pred_check_branch
    %8 = sbr.rel (0) target = $region5
  $region4: #{card_transformer.1} parent=0 // pred_region
    _
  $region5: #{card_transformer.1} parent=0 // pred_fallthru
    _
  // Predicated region
  $region6: #{card_transformer.1} parent=0 // pred_check
    _
  $region7: #{card_transformer.1} parent=0 // pred_check_branch
    %10 = sbr.rel (0) target = $region9
  $region8: #{card_transformer.1} parent=0 // pred_region
    _
  $region9: #{card_transformer.1} parent=0 // pred_fallthru
    _
  %v12 = vld [vmem:[%s0] sm:$0x1]
  %v13 = vld [vmem:[%s0 + $0x1] sm:$0x1]
  %v14 = vld [vmem:[%s0 + $0x2] sm:$0x1]
  %v15 = vld [vmem:[%s0 + $0x3] sm:$0x1]
  %v16 = vld [vmem:[%s0 + $0x4] sm:$0x1]
  %v17 = vld [vmem:[%s0 + $0x5] sm:$0x1]
  %v18 = vld [vmem:[%s0 + $0x6] sm:$0x1]
  %v19 = vld [vmem:[%s0 + $0x7] sm:$0x1]
  %v20 = vld [vmem:[%s0 + $0x8] sm:$0xff]
  %v21 = vld [vmem:[%s0 + $0x10] sm:$0xff]
  %v22 = vld [vmem:[%s1] sm:$0xf]
  %v23 = vld [vmem:[%s1 + $0x4] sm:$0xf]
  %v24 = vld [vmem:[%s1 + $0x8] sm:$0xf]
  %v25 = vld [vmem:[%s1 + $0xc] sm:$0xf]
  %v26 = vld [vmem:[%s1 + $0x10] sm:$0xf]
  %v27 = vld [vmem:[%s1 + $0x14] sm:$0xf]
  %v28 = vld [vmem:[%s1 + $0x18] sm:$0xf]
  %v29 = vld [vmem:[%s1 + $0x1c] sm:$0xf]
  %v30 = vld [vmem:[%s1 + $0x20] sm:$0xf]
  %v31 = vld [vmem:[%s1 + $0x24] sm:$0xf]
  %v32 = vld [vmem:[%s1 + $0x28] sm:$0xf]
  %v33 = vld [vmem:[%s1 + $0x2c] sm:$0xf]
  %v34 = vld [vmem:[%s1 + $0x30] sm:$0xf]
  %v35 = vld [vmem:[%s1 + $0x34] sm:$0xf]
  %v36 = vld [vmem:[%s1 + $0x38] sm:$0xf]
  %v37 = vld [vmem:[%s1 + $0x3c] sm:$0xf]
  %v38 = vld [vmem:[%s1 + $0x40] sm:$0xf]
  %v39 = vld [vmem:[%s1 + $0x44] sm:$0xf]
  %v40 = vld [vmem:[%s1 + $0x48] sm:$0xf]
  %v41 = vld [vmem:[%s1 + $0x4c] sm:$0xf]
  %v42 = vpack.c.bf16 %v21, %v20
  %v43 = vlaneseq
  %v44 = vshrl.u32 %v43, 7
  %v45 = vsub.s32 0, %v44
  %v46 = vrot.slane %v12, %v45
  %v51 = vunpack.c.l.b16 %v22
  %v52 = vunpack.c.l.b16 %v23
  %v53 = vunpack.c.l.b16 %v24
  %v54 = vunpack.c.l.b16 %v25
  %v55 = vpack.c.b16 %v52, %v51
  %v56 = vpack.c.b16 %v54, %v53
  %vm59 = vcmask 261120
  %v61 = vsel %vm59, %v42, 0
  %63 = vmatprep.subr.bf16.mxu0 0
  %64 = vmatpush1.bf16.msra.mxu0 0
  %65 = vmatprep.subr.bf16.mxu0 0
  %66 = vmatpush1.bf16.msra.mxu0 0
  %67 = vmatprep.subr.bf16.mxu0 0
  %68 = vmatpush1.bf16.msra.mxu0 0
  %69 = vmatprep.subr.bf16.mxu0 0
  %70 = vmatpush1.bf16.msra.mxu0 0
  %71 = vmatprep.subr.bf16.mxu0 0
  %72 = vmatpush1.bf16.msra.mxu0 0
  %73 = vmatprep.subr.bf16.mxu0 0
  %74 = vmatpush1.bf16.msra.mxu0 0
  %75 = vmatprep.subr.bf16.mxu0 0
  %76 = vmatpush1.bf16.msra.mxu0 %v56
  %77 = vmatprep.subr.bf16.mxu0 0
  %78 = vmatpush1.bf16.msra.mxu0 %v55
  %79 = vmatprep.subr.bf16.mxu0 0
  %80 = vmatpush2.bf16.msra.mxu0 0
  %81 = vmatprep.subr.bf16.mxu0 0
  %82 = vmatpush2.bf16.msra.mxu0 0
  %83 = vmatprep.subr.bf16.mxu0 0
  %84 = vmatpush2.bf16.msra.mxu0 0
  %85 = vmatprep.subr.bf16.mxu0 0
  %86 = vmatpush2.bf16.msra.mxu0 0
  %87 = vmatprep.subr.bf16.mxu0 0
  %88 = vmatpush2.bf16.msra.mxu0 0
  %89 = vmatprep.subr.bf16.mxu0 0
  %90 = vmatpush2.bf16.msra.mxu0 0
  %91 = vmatprep.subr.bf16.mxu0 0
  %92 = vmatpush2.bf16.msra.mxu0 0
  %93 = vmatprep.subr.bf16.mxu0 0
  %94 = vmatpush2.bf16.msra.mxu0 0
  %95 = vmatprep.mubr.bf16.mxu0 0
  %96 = vmatmul.mubr.bf16.gmra.mxu0 %v61
  %v97 = vpop.f32.mrf.mxu0
  %v98 = vadd.f32 %v46, %v97
  %v99 = vpop.f32.mrf.mxu0
  %v100 = vpop.f32.mrf.mxu0
  %v101 = vadd.f32 %v46, %v100
  %v102 = vpop.f32.mrf.mxu0
  %103 = vdwg.mxu0
  %v104 = vmul.f32 %v98, 0.35355338
  %v105 = vmul.f32 %v101, 0.35355338
  %v106 = vpack.c.bf16 %v101, %v98
  %v107 = vlaneseq
  %v108 = vand.u32 %v107, 127
  %vm109 = vcmp.ge.s32.totalorder %v108, 0
  %vm110 = vcmp.lt.s32.totalorder %v108, 8
  %vm111 = vmand %vm109, %vm110
  %v112 = vsel %vm111, 1.0, 0.0
  %vm113 = vcmp.ge.s32.totalorder %v108, 8
  %vm114 = vcmp.lt.s32.totalorder %v108, 16
  %vm115 = vmand %vm113, %vm114
  %v116 = vsel %vm115, 1.0, 0.0
  %vm117 = vcmp.ge.s32.totalorder %v108, 16
  %vm118 = vcmp.lt.s32.totalorder %v108, 24
  %vm119 = vmand %vm117, %vm118
  %v120 = vsel %vm119, 1.0, 0.0
  %vm121 = vcmp.ge.s32.totalorder %v108, 24
  %vm122 = vcmp.lt.s32.totalorder %v108, 32
  %vm123 = vmand %vm121, %vm122
  %v124 = vsel %vm123, 1.0, 0.0
  %v125 = vmul.f32 %v104, %v112
  %v126 = vmul.f32 %v105, %v112
  %v127 = vmul.f32 %v104, %v116
  %v128 = vmul.f32 %v105, %v116
  %v129 = vmul.f32 %v104, %v120
  %v130 = vmul.f32 %v105, %v120
  %v131 = vmul.f32 %v104, %v124
  %v132 = vmul.f32 %v105, %v124
  %v133 = vpack.c.bf16 %v126, %v125
  %v134 = vpack.c.bf16 %v128, %v127
  %v135 = vpack.c.bf16 %v130, %v129
  %v136 = vpack.c.bf16 %v132, %v131
  %138 = vrot.lane.b32.xlu0 %v106, 96
  %v139 = vpop.permute.xlu0 %138
  %142 = vrot.lane.b32.xlu0 %v20, 96
  %v143 = vpop.permute.xlu0 %142
  %144 = vrot.lane.b32.xlu0 %v21, 96
  %v145 = vpop.permute.xlu0 %144
  %v149 = vsel %vm59, %v133, 0
  %v152 = vsel %vm59, %v134, 0
  %v155 = vsel %vm59, %v135, 0
  %v158 = vsel %vm59, %v136, 0
  %v161 = vsel %vm59, %v139, 0
  %163 = vmatprep.subr.bf16.mxu0 0
  %164 = vmatpush1.bf16.xpose.msra.mxu0 0
  %165 = vmatprep.subr.bf16.mxu0 0
  %166 = vmatpush1.bf16.xpose.msra.mxu0 0
  %167 = vmatprep.subr.bf16.mxu0 0
  %168 = vmatpush1.bf16.xpose.msra.mxu0 0
  %169 = vmatprep.subr.bf16.mxu0 0
  %170 = vmatpush1.bf16.xpose.msra.mxu0 0
  %171 = vmatprep.subr.bf16.mxu0 0
  %172 = vmatpush1.bf16.xpose.msra.mxu0 0
  %173 = vmatprep.subr.bf16.mxu0 0
  %174 = vmatpush1.bf16.xpose.msra.mxu0 0
  %175 = vmatprep.subr.bf16.mxu0 0
  %176 = vmatpush1.bf16.xpose.msra.mxu0 0
  %177 = vmatprep.subr.bf16.mxu0 0
  %178 = vmatpush1.bf16.xpose.msra.mxu0 %v161
  %179 = vmatprep.subr.bf16.mxu0 0
  %180 = vmatpush2.bf16.xpose.msra.mxu0 0
  %181 = vmatprep.subr.bf16.mxu0 0
  %182 = vmatpush2.bf16.xpose.msra.mxu0 0
  %183 = vmatprep.subr.bf16.mxu0 0
  %184 = vmatpush2.bf16.xpose.msra.mxu0 0
  %185 = vmatprep.subr.bf16.mxu0 0
  %186 = vmatpush2.bf16.xpose.msra.mxu0 0
  %187 = vmatprep.subr.bf16.mxu0 0
  %188 = vmatpush2.bf16.xpose.msra.mxu0 0
  %189 = vmatprep.subr.bf16.mxu0 0
  %190 = vmatpush2.bf16.xpose.msra.mxu0 0
  %191 = vmatprep.subr.bf16.mxu0 0
  %192 = vmatpush2.bf16.xpose.msra.mxu0 0
  %193 = vmatprep.subr.bf16.mxu0 0
  %194 = vmatpush2.bf16.xpose.msra.mxu0 0
  %195 = vmatprep.mubr.bf16.mxu0 0
  %196 = vmatmul.mubr.bf16.gmra.mxu0 %v149
  %v197 = vpop.f32.mrf.mxu0
  %v198 = vadd.f32 %v143, %v197
  %v199 = vpop.f32.mrf.mxu0
  %v200 = vpop.f32.mrf.mxu0
  %v201 = vadd.f32 %v145, %v200
  %v202 = vpop.f32.mrf.mxu0
  %203 = vmatprep.mubr.bf16.mxu0 0
  %204 = vmatmul.mubr.bf16.gmra.mxu0 %v152
  %v205 = vpop.f32.mrf.mxu0
  %v206 = vadd.f32 %v143, %v205
  %v207 = vpop.f32.mrf.mxu0
  %v208 = vpop.f32.mrf.mxu0
  %v209 = vadd.f32 %v145, %v208
  %v210 = vpop.f32.mrf.mxu0
  %211 = vmatprep.mubr.bf16.mxu0 0
  %212 = vmatmul.mubr.bf16.gmra.mxu0 %v155
  %v213 = vpop.f32.mrf.mxu0
  %v214 = vadd.f32 %v143, %v213
  %v215 = vpop.f32.mrf.mxu0
  %v216 = vpop.f32.mrf.mxu0
  %v217 = vadd.f32 %v145, %v216
  %v218 = vpop.f32.mrf.mxu0
  %219 = vmatprep.mubr.bf16.mxu0 0
  %220 = vmatmul.mubr.bf16.gmra.mxu0 %v158
  %v221 = vpop.f32.mrf.mxu0
  %v222 = vadd.f32 %v143, %v221
  %v223 = vpop.f32.mrf.mxu0
  %v224 = vpop.f32.mrf.mxu0
  %v225 = vadd.f32 %v145, %v224
  %v226 = vpop.f32.mrf.mxu0
  %227 = vdwg.mxu0
  %vm228 = vcmask 130048
  %v229 = vsel %vm228, %v198, -inf
  %230 = vmax.xlane.f32.xlu0 %v229
  %v231 = vpop.xlane.xlu0 %230
  %v232 = vsel %vm228, %v201, -inf
  %233 = vmax.xlane.f32.xlu0 %v232
  %v234 = vpop.xlane.xlu0 %233
  %v235 = vsel %vm228, %v206, -inf
  %236 = vmax.xlane.f32.xlu0 %v235
  %v237 = vpop.xlane.xlu0 %236
  %v238 = vsel %vm228, %v209, -inf
  %239 = vmax.xlane.f32.xlu0 %v238
  %v240 = vpop.xlane.xlu0 %239
  %v241 = vsel %vm228, %v214, -inf
  %242 = vmax.xlane.f32.xlu0 %v241
  %v243 = vpop.xlane.xlu0 %242
  %v244 = vsel %vm228, %v217, -inf
  %245 = vmax.xlane.f32.xlu0 %v244
  %v246 = vpop.xlane.xlu0 %245
  %v247 = vsel %vm228, %v222, -inf
  %248 = vmax.xlane.f32.xlu0 %v247
  %v249 = vpop.xlane.xlu0 %248
  %v250 = vsel %vm228, %v225, -inf
  %251 = vmax.xlane.f32.xlu0 %v250
  %v252 = vpop.xlane.xlu0 %251
  %v253 = vsub.f32 %v198, %v231
  %v254 = vsub.f32 %v201, %v234
  %v255 = vsub.f32 %v206, %v237
  %v256 = vsub.f32 %v209, %v240
  %v257 = vsub.f32 %v214, %v243
  %v258 = vsub.f32 %v217, %v246
  %v259 = vsub.f32 %v222, %v249
  %v260 = vsub.f32 %v225, %v252
  %v261 = vmul.f32 %v253, 1.442695
  %v262 = vpow.pop %v261
  %v263 = vmul.f32 %v254, 1.442695
  %v264 = vpow.pop %v263
  %v265 = vmul.f32 %v255, 1.442695
  %v266 = vpow.pop %v265
  %v267 = vmul.f32 %v256, 1.442695
  %v268 = vpow.pop %v267
  %v269 = vmul.f32 %v257, 1.442695
  %v270 = vpow.pop %v269
  %v271 = vmul.f32 %v258, 1.442695
  %v272 = vpow.pop %v271
  %v273 = vmul.f32 %v259, 1.442695
  %v274 = vpow.pop %v273
  %v275 = vmul.f32 %v260, 1.442695
  %v276 = vpow.pop %v275
  %v277 = vsel %vm228, %v262, 0.0
  %278 = vadd.xlane.f32.xlu0 %v277
  %v279 = vpop.xlane.xlu0 %278
  %v280 = vsel %vm228, %v264, 0.0
  %281 = vadd.xlane.f32.xlu0 %v280
  %v282 = vpop.xlane.xlu0 %281
  %v283 = vsel %vm228, %v266, 0.0
  %284 = vadd.xlane.f32.xlu0 %v283
  %v285 = vpop.xlane.xlu0 %284
  %v286 = vsel %vm228, %v268, 0.0
  %287 = vadd.xlane.f32.xlu0 %v286
  %v288 = vpop.xlane.xlu0 %287
  %v289 = vsel %vm228, %v270, 0.0
  %290 = vadd.xlane.f32.xlu0 %v289
  %v291 = vpop.xlane.xlu0 %290
  %v292 = vsel %vm228, %v272, 0.0
  %293 = vadd.xlane.f32.xlu0 %v292
  %v294 = vpop.xlane.xlu0 %293
  %v295 = vsel %vm228, %v274, 0.0
  %296 = vadd.xlane.f32.xlu0 %v295
  %v297 = vpop.xlane.xlu0 %296
  %v298 = vsel %vm228, %v276, 0.0
  %299 = vadd.xlane.f32.xlu0 %v298
  %v300 = vpop.xlane.xlu0 %299
  %v301 = vrcp.pop %v279
  %v302 = vrcp.pop %v282
  %v303 = vrcp.pop %v285
  %v304 = vrcp.pop %v288
  %v305 = vrcp.pop %v291
  %v306 = vrcp.pop %v294
  %v307 = vrcp.pop %v297
  %v308 = vrcp.pop %v300
  %v309 = vmul.f32 %v262, %v301
  %v310 = vmul.f32 %v264, %v302
  %v311 = vmul.f32 %v266, %v303
  %v312 = vmul.f32 %v268, %v304
  %v313 = vmul.f32 %v270, %v305
  %v314 = vmul.f32 %v272, %v306
  %v315 = vmul.f32 %v274, %v307
  %v316 = vmul.f32 %v276, %v308
  %v317 = vpack.c.bf16 %v310, %v309
  %v318 = vpack.c.bf16 %v312, %v311
  %v319 = vpack.c.bf16 %v314, %v313
  %v320 = vpack.c.bf16 %v316, %v315
  %321 = vrot.lane.b32.xlu0 %v106, 64
  %v322 = vpop.permute.xlu0 %321
  %v325 = vsel %vm228, %v317, 0
  %v328 = vsel %vm228, %v318, 0
  %v331 = vsel %vm228, %v319, 0
  %v334 = vsel %vm228, %v320, 0
  %336 = vmatprep.subr.bf16.mxu0 0
  %337 = vmatpush1.bf16.msra.mxu0 0
  %338 = vmatprep.subr.bf16.mxu0 0
  %339 = vmatpush1.bf16.msra.mxu0 0
  %340 = vmatprep.subr.bf16.mxu0 0
  %341 = vmatpush1.bf16.msra.mxu0 0
  %342 = vmatprep.subr.bf16.mxu0 0
  %343 = vmatpush1.bf16.msra.mxu0 0
  %344 = vmatprep.subr.bf16.mxu0 0
  %345 = vmatpush1.bf16.msra.mxu0 0
  %346 = vmatprep.subr.bf16.mxu0 0
  %347 = vmatpush1.bf16.msra.mxu0 0
  %348 = vmatprep.subr.bf16.mxu0 0
  %349 = vmatpush1.bf16.msra.mxu0 0
  %350 = vmatprep.subr.bf16.mxu0 0
  %351 = vmatpush1.bf16.msra.mxu0 %v322
  %352 = vmatprep.subr.bf16.mxu0 0
  %353 = vmatpush2.bf16.msra.mxu0 0
  %354 = vmatprep.subr.bf16.mxu0 0
  %355 = vmatpush2.bf16.msra.mxu0 0
  %356 = vmatprep.subr.bf16.mxu0 0
  %357 = vmatpush2.bf16.msra.mxu0 0
  %358 = vmatprep.subr.bf16.mxu0 0
  %359 = vmatpush2.bf16.msra.mxu0 0
  %360 = vmatprep.subr.bf16.mxu0 0
  %361 = vmatpush2.bf16.msra.mxu0 0
  %362 = vmatprep.subr.bf16.mxu0 0
  %363 = vmatpush2.bf16.msra.mxu0 0
  %364 = vmatprep.subr.bf16.mxu0 0
  %365 = vmatpush2.bf16.msra.mxu0 0
  %366 = vmatprep.subr.bf16.mxu0 0
  %367 = vmatpush2.bf16.msra.mxu0 0
  %368 = vmatprep.mubr.bf16.mxu0 0
  %369 = vmatmul.mubr.bf16.gmra.mxu0 %v325
  %v370 = vpop.f32.mrf.mxu0
  %v371 = vadd.f32 0.0, %v370
  %v372 = vpop.f32.mrf.mxu0
  %v373 = vpop.f32.mrf.mxu0
  %v374 = vadd.f32 0.0, %v373
  %v375 = vpop.f32.mrf.mxu0
  %376 = vmatprep.mubr.bf16.mxu0 0
  %377 = vmatmul.mubr.bf16.gmra.mxu0 %v328
  %v378 = vpop.f32.mrf.mxu0
  %v379 = vadd.f32 0.0, %v378
  %v380 = vpop.f32.mrf.mxu0
  %v381 = vpop.f32.mrf.mxu0
  %v382 = vadd.f32 0.0, %v381
  %v383 = vpop.f32.mrf.mxu0
  %384 = vmatprep.mubr.bf16.mxu0 0
  %385 = vmatmul.mubr.bf16.gmra.mxu0 %v331
  %v386 = vpop.f32.mrf.mxu0
  %v387 = vadd.f32 0.0, %v386
  %v388 = vpop.f32.mrf.mxu0
  %v389 = vpop.f32.mrf.mxu0
  %v390 = vadd.f32 0.0, %v389
  %v391 = vpop.f32.mrf.mxu0
  %392 = vmatprep.mubr.bf16.mxu0 0
  %393 = vmatmul.mubr.bf16.gmra.mxu0 %v334
  %v394 = vpop.f32.mrf.mxu0
  %v395 = vadd.f32 0.0, %v394
  %v396 = vpop.f32.mrf.mxu0
  %v397 = vpop.f32.mrf.mxu0
  %v398 = vadd.f32 0.0, %v397
  %v399 = vpop.f32.mrf.mxu0
  %400 = vdwg.mxu0
  %v401 = vmul.f32 %v371, %v112
  %v402 = vmul.f32 %v374, %v112
  %v403 = vmul.f32 %v379, %v116
  %v404 = vmul.f32 %v382, %v116
  %v405 = vadd.f32 %v401, %v403
  %v406 = vadd.f32 %v402, %v404
  %v407 = vmul.f32 %v387, %v120
  %v408 = vmul.f32 %v390, %v120
  %v409 = vadd.f32 %v405, %v407
  %v410 = vadd.f32 %v406, %v408
  %v411 = vmul.f32 %v395, %v124
  %v412 = vmul.f32 %v398, %v124
  %v413 = vadd.f32 %v409, %v411
  %v414 = vadd.f32 %v410, %v412
  %v415 = vpack.c.bf16 %v414, %v413
  %v416 = vlaneseq
  %v417 = vshrl.u32 %v416, 7
  %v418 = vsub.s32 0, %v417
  %v419 = vrot.slane %v13, %v418
  %v424 = vunpack.c.l.b16 %v26
  %v425 = vunpack.c.l.b16 %v27
  %v426 = vunpack.c.l.b16 %v28
  %v427 = vunpack.c.l.b16 %v29
  %v428 = vpack.c.b16 %v425, %v424
  %v429 = vpack.c.b16 %v427, %v426
  %v433 = vsel %vm59, %v415, 0
  %435 = vmatprep.subr.bf16.mxu0 0
  %436 = vmatpush1.bf16.msra.mxu0 0
  %437 = vmatprep.subr.bf16.mxu0 0
  %438 = vmatpush1.bf16.msra.mxu0 0
  %439 = vmatprep.subr.bf16.mxu0 0
  %440 = vmatpush1.bf16.msra.mxu0 0
  %441 = vmatprep.subr.bf16.mxu0 0
  %442 = vmatpush1.bf16.msra.mxu0 0
  %443 = vmatprep.subr.bf16.mxu0 0
  %444 = vmatpush1.bf16.msra.mxu0 0
  %445 = vmatprep.subr.bf16.mxu0 0
  %446 = vmatpush1.bf16.msra.mxu0 0
  %447 = vmatprep.subr.bf16.mxu0 0
  %448 = vmatpush1.bf16.msra.mxu0 %v429
  %449 = vmatprep.subr.bf16.mxu0 0
  %450 = vmatpush1.bf16.msra.mxu0 %v428
  %451 = vmatprep.subr.bf16.mxu0 0
  %452 = vmatpush2.bf16.msra.mxu0 0
  %453 = vmatprep.subr.bf16.mxu0 0
  %454 = vmatpush2.bf16.msra.mxu0 0
  %455 = vmatprep.subr.bf16.mxu0 0
  %456 = vmatpush2.bf16.msra.mxu0 0
  %457 = vmatprep.subr.bf16.mxu0 0
  %458 = vmatpush2.bf16.msra.mxu0 0
  %459 = vmatprep.subr.bf16.mxu0 0
  %460 = vmatpush2.bf16.msra.mxu0 0
  %461 = vmatprep.subr.bf16.mxu0 0
  %462 = vmatpush2.bf16.msra.mxu0 0
  %463 = vmatprep.subr.bf16.mxu0 0
  %464 = vmatpush2.bf16.msra.mxu0 0
  %465 = vmatprep.subr.bf16.mxu0 0
  %466 = vmatpush2.bf16.msra.mxu0 0
  %467 = vmatprep.mubr.bf16.mxu0 0
  %468 = vmatmul.mubr.bf16.gmra.mxu0 %v433
  %v469 = vpop.f32.mrf.mxu0
  %v470 = vadd.f32 %v419, %v469
  %v471 = vpop.f32.mrf.mxu0
  %v472 = vpop.f32.mrf.mxu0
  %v473 = vadd.f32 %v419, %v472
  %v474 = vpop.f32.mrf.mxu0
  %475 = vdwg.mxu0
  %476 = vset.pattern.permute.xlu0 48
  %477 = vperm.xlu0 %476, %v20
  %v478 = vpop.permute.xlu0 %477
  %480 = vset.pattern.permute.xlu0 48
  %481 = vperm.xlu0 %480, %v21
  %v482 = vpop.permute.xlu0 %481
  %v484 = vmul.f32 %v470, %v478
  %v485 = vmul.f32 %v473, %v482
  %v486 = vadd.f32 %v20, %v484
  %v487 = vadd.f32 %v21, %v485
  %v488 = vsel %vm59, %v486, 0.0
  %489 = vadd.xlane.f32.xlu0 %v488
  %v490 = vpop.xlane.xlu0 %489
  %v491 = vsel %vm59, %v487, 0.0
  %492 = vadd.xlane.f32.xlu0 %v491
  %v493 = vpop.xlane.xlu0 %492
  %v494 = vrcp.pop 32.0
  %v495 = vmul.f32 %v490, %v494
  %v496 = vmul.f32 %v493, %v494
  %v497 = vsub.f32 %v486, %v495
  %v498 = vsub.f32 %v487, %v496
  %v499 = vmul.f32 %v497, %v497
  %v500 = vmul.f32 %v498, %v498
  %v501 = vsel %vm59, %v499, 0.0
  %502 = vadd.xlane.f32.xlu0 %v501
  %v503 = vpop.xlane.xlu0 %502
  %v504 = vsel %vm59, %v500, 0.0
  %505 = vadd.xlane.f32.xlu0 %v504
  %v506 = vpop.xlane.xlu0 %505
  %v507 = vmul.f32 %v503, %v494
  %v508 = vmul.f32 %v506, %v494
  %v509 = vadd.f32 %v507, 1e-05
  %v510 = vadd.f32 %v508, 1e-05
  %v511 = vrsqrt.pop %v509
  %v512 = vrsqrt.pop %v510
  %v513 = vmul.f32 %v497, %v511
  %v514 = vmul.f32 %v498, %v512
  %v515 = vlaneseq
  %v516 = vshrl.u32 %v515, 7
  %v517 = vsub.s32 0, %v516
  %v518 = vrot.slane %v14, %v517
  %v519 = vmul.f32 %v513, %v518
  %v520 = vmul.f32 %v514, %v518
  %v521 = vlaneseq
  %v522 = vshrl.u32 %v521, 7
  %v523 = vsub.s32 0, %v522
  %v524 = vrot.slane %v15, %v523
  %v525 = vadd.f32 %v519, %v524
  %v526 = vadd.f32 %v520, %v524
  %v527 = vpack.c.bf16 %v526, %v525
  %v528 = vlaneseq
  %v529 = vshrl.u32 %v528, 7
  %v530 = vsub.s32 0, %v529
  %v531 = vrot.slane %v16, %v530
  %v536 = vunpack.c.l.b16 %v30
  %v537 = vunpack.c.l.b16 %v31
  %v538 = vunpack.c.l.b16 %v32
  %v539 = vunpack.c.l.b16 %v33
  %v540 = vpack.c.b16 %v537, %v536
  %v541 = vpack.c.b16 %v539, %v538
  %v545 = vsel %vm59, %v527, 0
  %547 = vmatprep.subr.bf16.mxu0 0
  %548 = vmatpush1.bf16.msra.mxu0 0
  %549 = vmatprep.subr.bf16.mxu0 0
  %550 = vmatpush1.bf16.msra.mxu0 0
  %551 = vmatprep.subr.bf16.mxu0 0
  %552 = vmatpush1.bf16.msra.mxu0 0
  %553 = vmatprep.subr.bf16.mxu0 0
  %554 = vmatpush1.bf16.msra.mxu0 0
  %555 = vmatprep.subr.bf16.mxu0 0
  %556 = vmatpush1.bf16.msra.mxu0 0
  %557 = vmatprep.subr.bf16.mxu0 0
  %558 = vmatpush1.bf16.msra.mxu0 0
  %559 = vmatprep.subr.bf16.mxu0 0
  %560 = vmatpush1.bf16.msra.mxu0 %v541
  %561 = vmatprep.subr.bf16.mxu0 0
  %562 = vmatpush1.bf16.msra.mxu0 %v540
  %563 = vmatprep.subr.bf16.mxu0 0
  %564 = vmatpush2.bf16.msra.mxu0 0
  %565 = vmatprep.subr.bf16.mxu0 0
  %566 = vmatpush2.bf16.msra.mxu0 0
  %567 = vmatprep.subr.bf16.mxu0 0
  %568 = vmatpush2.bf16.msra.mxu0 0
  %569 = vmatprep.subr.bf16.mxu0 0
  %570 = vmatpush2.bf16.msra.mxu0 0
  %571 = vmatprep.subr.bf16.mxu0 0
  %572 = vmatpush2.bf16.msra.mxu0 0
  %573 = vmatprep.subr.bf16.mxu0 0
  %574 = vmatpush2.bf16.msra.mxu0 0
  %575 = vmatprep.subr.bf16.mxu0 0
  %576 = vmatpush2.bf16.msra.mxu0 0
  %577 = vmatprep.subr.bf16.mxu0 0
  %578 = vmatpush2.bf16.msra.mxu0 0
  %579 = vmatprep.mubr.bf16.mxu0 0
  %580 = vmatmul.mubr.bf16.gmra.mxu0 %v545
  %v581 = vpop.f32.mrf.mxu0
  %v582 = vadd.f32 %v531, %v581
  %v583 = vpop.f32.mrf.mxu0
  %v584 = vpop.f32.mrf.mxu0
  %v585 = vadd.f32 %v531, %v584
  %v586 = vpop.f32.mrf.mxu0
  %587 = vdwg.mxu0
  %v588 = vmax.f32 %v582, 0.0
  %v589 = vmax.f32 %v585, 0.0
  %v590 = vpack.c.bf16 %v589, %v588
  %v591 = vlaneseq
  %v592 = vshrl.u32 %v591, 7
  %v593 = vsub.s32 0, %v592
  %v594 = vrot.slane %v17, %v593
  %v603 = vunpack.c.l.b16 %v34
  %v604 = vunpack.c.l.b16 %v35
  %v605 = vunpack.c.l.b16 %v36
  %v606 = vunpack.c.l.b16 %v37
  %v607 = vunpack.c.l.b16 %v38
  %v608 = vunpack.c.l.b16 %v39
  %v609 = vunpack.c.l.b16 %v40
  %v610 = vunpack.c.l.b16 %v41
  %v611 = vpack.c.b16 %v604, %v603
  %v612 = vpack.c.b16 %v606, %v605
  %v613 = vpack.c.b16 %v608, %v607
  %v614 = vpack.c.b16 %v610, %v609
  %vm619 = vcmask 523264
  %v621 = vsel %vm619, %v590, 0
  %623 = vmatprep.subr.bf16.mxu0 0
  %624 = vmatpush1.bf16.msra.mxu0 0
  %625 = vmatprep.subr.bf16.mxu0 0
  %626 = vmatpush1.bf16.msra.mxu0 0
  %627 = vmatprep.subr.bf16.mxu0 0
  %628 = vmatpush1.bf16.msra.mxu0 0
  %629 = vmatprep.subr.bf16.mxu0 0
  %630 = vmatpush1.bf16.msra.mxu0 0
  %631 = vmatprep.subr.bf16.mxu0 0
  %632 = vmatpush1.bf16.msra.mxu0 %v614
  %633 = vmatprep.subr.bf16.mxu0 0
  %634 = vmatpush1.bf16.msra.mxu0 %v613
  %635 = vmatprep.subr.bf16.mxu0 0
  %636 = vmatpush1.bf16.msra.mxu0 %v612
  %637 = vmatprep.subr.bf16.mxu0 0
  %638 = vmatpush1.bf16.msra.mxu0 %v611
  %639 = vmatprep.subr.bf16.mxu0 0
  %640 = vmatpush2.bf16.msra.mxu0 0
  %641 = vmatprep.subr.bf16.mxu0 0
  %642 = vmatpush2.bf16.msra.mxu0 0
  %643 = vmatprep.subr.bf16.mxu0 0
  %644 = vmatpush2.bf16.msra.mxu0 0
  %645 = vmatprep.subr.bf16.mxu0 0
  %646 = vmatpush2.bf16.msra.mxu0 0
  %647 = vmatprep.subr.bf16.mxu0 0
  %648 = vmatpush2.bf16.msra.mxu0 0
  %649 = vmatprep.subr.bf16.mxu0 0
  %650 = vmatpush2.bf16.msra.mxu0 0
  %651 = vmatprep.subr.bf16.mxu0 0
  %652 = vmatpush2.bf16.msra.mxu0 0
  %653 = vmatprep.subr.bf16.mxu0 0
  %654 = vmatpush2.bf16.msra.mxu0 0
  %655 = vmatprep.mubr.bf16.mxu0 0
  %656 = vmatmul.mubr.bf16.gmra.mxu0 %v621
  %v657 = vpop.f32.mrf.mxu0
  %v658 = vadd.f32 %v594, %v657
  %v659 = vpop.f32.mrf.mxu0
  %v660 = vpop.f32.mrf.mxu0
  %v661 = vadd.f32 %v594, %v660
  %v662 = vpop.f32.mrf.mxu0
  %663 = vdwg.mxu0
  %v664 = vadd.f32 %v525, %v658
  %v665 = vadd.f32 %v526, %v661
  %v666 = vsel %vm59, %v664, 0.0
  %667 = vadd.xlane.f32.xlu0 %v666
  %v668 = vpop.xlane.xlu0 %667
  %v669 = vsel %vm59, %v665, 0.0
  %670 = vadd.xlane.f32.xlu0 %v669
  %v671 = vpop.xlane.xlu0 %670
  %v672 = vmul.f32 %v668, %v494
  %v673 = vmul.f32 %v671, %v494
  %v674 = vsub.f32 %v664, %v672
  %v675 = vsub.f32 %v665, %v673
  %v676 = vmul.f32 %v674, %v674
  %v677 = vmul.f32 %v675, %v675
  %v678 = vsel %vm59, %v676, 0.0
  %679 = vadd.xlane.f32.xlu0 %v678
  %v680 = vpop.xlane.xlu0 %679
  %v681 = vsel %vm59, %v677, 0.0
  %682 = vadd.xlane.f32.xlu0 %v681
  %v683 = vpop.xlane.xlu0 %682
  %v684 = vmul.f32 %v680, %v494
  %v685 = vmul.f32 %v683, %v494
  %v686 = vadd.f32 %v684, 1e-05
  %v687 = vadd.f32 %v685, 1e-05
  %v688 = vrsqrt.pop %v686
  %v689 = vrsqrt.pop %v687
  %v690 = vmul.f32 %v674, %v688
  %v691 = vmul.f32 %v675, %v689
  %v692 = vlaneseq
  %v693 = vshrl.u32 %v692, 7
  %v694 = vsub.s32 0, %v693
  %v695 = vrot.slane %v18, %v694
  %v696 = vmul.f32 %v690, %v695
  %v697 = vmul.f32 %v691, %v695
  %v698 = vlaneseq
  %v699 = vshrl.u32 %v698, 7
  %v700 = vsub.s32 0, %v699
  %v701 = vrot.slane %v19, %v700
  %v702 = vadd.f32 %v696, %v701
  %v703 = vadd.f32 %v697, %v701
  %v704 = vsel %vm59, %v702, 0.0
  %v705 = vsel %vm59, %v703, 0.0
  %706 = vst [vmem:[%s2] sm:$0xff] %v704
  %707 = vst [vmem:[%s2 + $0x8] sm:$0xff] %v705
  // Predicated region
  $region10: #{card_transformer.1} parent=0 // pred_check
    _
  $region11: #{card_transformer.1} parent=0 // pred_check_branch
    %709 = sbr.rel (0) target = $region13
  $region12: #{card_transformer.1} parent=0 // pred_region
    _
  $region13: #{card_transformer.1} parent=0 // pred_fallthru
    _
  // Predicated region
  $region14: #{card_transformer.1} parent=0 // pred_check
    _
  $region15: #{card_transformer.1} parent=0 // pred_check_branch
    %711 = sbr.rel (0) target = $region17
  $region16: #{card_transformer.1} parent=0 // pred_region
    _
  $region17: #{card_transformer.1} parent=0 // pred_fallthru
    _

</llo_original>
